<compile_context>
chip_gen: v5e
topology: v5e:2x2
jax: 0.10.0
libtpu: 0.0.40
codegen_flags: <defaults>
</compile_context>

<pallas_src>
import functools

import jax
import jax.numpy as jnp
from jax.experimental import pallas as pl
from jax.experimental.pallas import tpu as pltpu

_LANE = 128      # lane width: pad output-feature dims to multiples of this
_SUBLANE = 8     # sublane width: batch tiles are multiples of this


def _round_up(x, m):
    return ((x + m - 1) // m) * m


# ---------------------------------------------------------------------------
# One-time probe: does this JAX build honor pipeline_mode=pl.Buffered(1) on a
# top-level pallas_call BlockSpec?  (Constant-index weight blocks gain nothing
# from double-buffering; single-buffering halves their VMEM footprint.)
# ---------------------------------------------------------------------------
@functools.lru_cache(maxsize=None)
def _buffered_single_ok():
    try:
        spec = pl.BlockSpec((8, 128), lambda i: (0, 0), pipeline_mode=pl.Buffered(1))
    except Exception:
        return False
    try:
        def _copy(x_ref, o_ref):
            o_ref[...] = x_ref[...]
        y = pl.pallas_call(
            _copy,
            out_shape=jax.ShapeDtypeStruct((8, 128), jnp.float32),
            grid=(1,),
            in_specs=[spec],
            out_specs=pl.BlockSpec((8, 128), lambda i: (0, 0)),
        )(jnp.zeros((8, 128), jnp.float32))
        jax.block_until_ready(y)
        return True
    except Exception:
        return False


def _param_spec(shape):
    """Full-array BlockSpec for a weight/bias that is constant across the grid."""
    idx_map = lambda i: (0,) * len(shape)
    if _buffered_single_ok():
        return pl.BlockSpec(shape, idx_map, pipeline_mode=pl.Buffered(1))
    return pl.BlockSpec(shape, idx_map)


# ---------------------------------------------------------------------------
# Fused MLP kernel: all layers in one body; intermediates stay in vregs/VMEM.
# MXU matmuls (f32 accumulation), VPU bias+ReLU.
# ---------------------------------------------------------------------------
def _fused_mlp_kernel(*refs, n_layers: int):
    # refs = (x_ref, w0, b0, w1, b1, ..., w_{L-1}, b_{L-1}, o_ref)
    x_ref = refs[0]
    o_ref = refs[-1]
    wb = refs[1:-1]

    y = x_ref[...].astype(jnp.float32)
    for l in range(n_layers):
        w = wb[2 * l][...]
        b = wb[2 * l + 1][...]
        y = jnp.dot(y.astype(w.dtype), w, preferred_element_type=jnp.float32)
        y = y + b.astype(jnp.float32)
        if l != n_layers - 1:
            y = jnp.maximum(y, 0.0)
            # TODO(synk): dropout is identity (eval mode); training-mode dropout
            # would use pltpu.prng_seed / pltpu.stateful_bernoulli here.
    o_ref[...] = y.astype(o_ref.dtype)
    # TODO(synk): if bundle dumps show vld/vst slot saturation at large
    # tb/hid_pad, stage y through an explicit pltpu.VMEM scratch instead of
    # letting the compiler pick spill locations.


def _fused_mlp_call(x, padded_params, *, tb):
    """Single pallas_call over the whole (lane-dense-padded) MLP."""
    B, in_dim = x.shape
    n_layers = len(padded_params)
    out_pad = padded_params[-1][0].shape[1]

    grid = (pl.cdiv(B, tb),)   # remainder batch block is masked by Pallas

    in_specs = [pl.BlockSpec((tb, in_dim), lambda i: (i, 0))]
    flat_params = []
    for (w, b) in padded_params:
        in_specs.append(_param_spec(w.shape))
        in_specs.append(_param_spec(b.shape))
        flat_params += [w, b]

    # --- static VMEM budget (all shapes/dtypes are static at trace time) ----
    param_bytes = sum(w.size * w.dtype.itemsize + b.size * b.dtype.itemsize
                      for (w, b) in padded_params)
    max_feat = max(w.shape[1] for (w, _) in padded_params)
    act_bytes = (2 * tb * in_dim * x.dtype.itemsize   # double-buffered input tiles
                 + 2 * tb * out_pad * 4               # double-buffered f32 output tiles
                 + 2 * tb * max_feat * 4)             # in-flight f32 intermediates
    vmem_limit = int(min(max(int(1.25 * (param_bytes + act_bytes)) + (4 << 20),
                             16 << 20),
                         64 << 20))                   # stay inside v7x's 64 MiB
    if param_bytes > (40 << 20):
        # TODO(synk): weights no longer fit resident on v7x (64 MiB VMEM); move the
        # weight specs to memory_space=pl.ANY and pltpu.emit_pipeline over hid_dim.
        pass

    # Advisory cost estimate (batch is exact; padded feature dims over-count a bit).
    flops = sum(2 * B * w.shape[0] * w.shape[1] for (w, _) in padded_params)
    bytes_accessed = (x.size * x.dtype.itemsize + param_bytes + B * out_pad * 4)

    kernel = functools.partial(_fused_mlp_kernel, n_layers=n_layers)

    return pl.pallas_call(
        kernel,
        out_shape=jax.ShapeDtypeStruct((B, out_pad), jnp.float32),  # pinned f32
        grid=grid,
        in_specs=in_specs,
        out_specs=pl.BlockSpec((tb, out_pad), lambda i: (i, 0)),
        compiler_params=pltpu.CompilerParams(
            dimension_semantics=("parallel",),   # shards batch tiles over v7x's 2 TCs
            vmem_limit_bytes=vmem_limit,
        ),
        cost_estimate=pl.CostEstimate(
            flops=flops, transcendentals=0, bytes_accessed=bytes_accessed),
    )(x, *flat_params)


# ---------------------------------------------------------------------------
# Parameter init + one-time preprocessing (padding / layout / dtype).
# ---------------------------------------------------------------------------
def init_forecasting_params(key, in_dim, hid_dim, out_dim, n_layers):
    """nn.Linear-style init (uniform +/- 1/sqrt(fan_in)); W stored [fan_in, fan_out]."""
    dims = [(in_dim, hid_dim)]
    dims += [(hid_dim, hid_dim)] * (n_layers - 1)
    dims += [(hid_dim, out_dim)]

    params = []
    for (fan_in, fan_out) in dims:
        key, kw, kb = jax.random.split(key, 3)
        bound = 1.0 / jnp.sqrt(jnp.float32(fan_in))
        w = jax.random.uniform(kw, (fan_in, fan_out), jnp.float32, -bound, bound)
        b = jax.random.uniform(kb, (fan_out,), jnp.float32, -bound, bound)
        params.append((w, b))
    return params


def preprocess_params(params, dtype=jnp.float32):
    """One-time: zero-pad fan_out of every layer (and fan_in of layers > 0, which
    equals the previous layer's padded fan_out) to multiples of 128, reshape bias
    to [1, Dout_pad], cast to the compute dtype (jnp.bfloat16 on v6e/v7x for 2x
    MXU throughput and half the DMA; accumulation stays f32 in-kernel).
    Layer-0's fan_in is kept at in_dim so x needs NO feature-dim padding.
    TODO(synk): for hid_dim >= ~512 on v6e/v7x, pad hidden dims to 256 (2x256x256 MXU).
    """
    padded = []
    prev_out_pad = None
    for li, (w, b) in enumerate(params):
        fan_in, fan_out = w.shape
        in_pad = fan_in if li == 0 else prev_out_pad
        out_pad = _round_up(fan_out, _LANE)
        w_p = jnp.zeros((in_pad, out_pad), dtype).at[:fan_in, :fan_out].set(
            w.astype(dtype))
        b_p = jnp.zeros((1, out_pad), dtype).at[0, :fan_out].set(b.astype(dtype))
        padded.append((w_p, b_p))
        prev_out_pad = out_pad
    return padded


def _pick_batch_tile(batch):
    """>= 2 tiles when the batch permits (so v7x's two TCs both get work via the
    "parallel" axis); tiles capped at 512 rows and kept sublane-aligned."""
    tb = _round_up(max(1, pl.cdiv(batch, 2)), _SUBLANE)
    return int(max(_SUBLANE, min(512, tb)))


# ---------------------------------------------------------------------------
# Jitted forward: no wrapper-side padding/copies of x; single fused kernel;
# slice the valid output columns.
# ---------------------------------------------------------------------------
@functools.partial(jax.jit, static_argnames=("out_dim",))
def forecasting_model_forward(x, padded_params, out_dim):
    """Forward identical to Forecasting_Model.forward (eval mode).

    x: [batch, in_dim] float32; padded_params from preprocess_params.
    Returns float32 [batch, out_dim] regardless of the compute dtype.
    """
    compute_dtype = padded_params[0][0].dtype
    tb = _pick_batch_tile(x.shape[0])
    y_pad = _fused_mlp_call(x.astype(compute_dtype), padded_params, tb=tb)
    return y_pad[:, :out_dim]


if __name__ == "__main__":
    # Small shapes consistent with the module's __init__.
    batch = 8
    in_dim = 16
    hid_dim = 32
    out_dim = 8
    n_layers = 2
    dropout = 0.1  # unused at inference

    key = jax.random.PRNGKey(0)
    key, kx = jax.random.split(key)
    x = jax.random.normal(kx, (batch, in_dim), jnp.float32)

    params = init_forecasting_params(key, in_dim, hid_dim, out_dim, n_layers)
    padded_params = preprocess_params(params, dtype=jnp.float32)

    out = forecasting_model_forward(x, padded_params, out_dim)
    out = jax.block_until_ready(out)

    # Pure-JAX reference for sanity (eval mode: dropout is identity).
    ref = x
    for (w, b) in params[:-1]:
        ref = jnp.maximum(ref @ w + b, 0.0)
    ref = ref @ params[-1][0] + params[-1][1]

    assert out.shape == (batch, out_dim)
    assert jnp.allclose(out, ref, atol=1e-5, rtol=1e-5), float(
        jnp.max(jnp.abs(out - ref)))

    print("KERNEL_OK")
</pallas_src>

<mosaic_0001>
module attributes {stable_mosaic.version = 11 : i64} {
  func.func @_fused_mlp_kernel(%arg0: i32, %arg1: memref<8x16xf32, #tpu.memory_space<vmem>>, %arg2: memref<16x128xf32, #tpu.memory_space<vmem>>, %arg3: memref<1x128xf32, #tpu.memory_space<vmem>>, %arg4: memref<128x128xf32, #tpu.memory_space<vmem>>, %arg5: memref<1x128xf32, #tpu.memory_space<vmem>>, %arg6: memref<128x128xf32, #tpu.memory_space<vmem>>, %arg7: memref<1x128xf32, #tpu.memory_space<vmem>>, %arg8: memref<8x128xf32, #tpu.memory_space<vmem>>) attributes {dimension_semantics = [#tpu.dimension_semantics<parallel>], iteration_bounds = array<i64: 1>, scalar_prefetch = 0 : i64, scratch_operands = 0 : i64, tpu.core_type = #tpu.core_type<tc>, window_params = [{transform_indices = @transform_0, window_bounds = array<i64: 8, 16>}, {pipeline_mode = #tpu.pipeline_mode<synchronous>, transform_indices = @transform_1, window_bounds = array<i64: 16, 128>}, {pipeline_mode = #tpu.pipeline_mode<synchronous>, transform_indices = @transform_2, window_bounds = array<i64: 1, 128>}, {pipeline_mode = #tpu.pipeline_mode<synchronous>, transform_indices = @transform_3, window_bounds = array<i64: 128, 128>}, {pipeline_mode = #tpu.pipeline_mode<synchronous>, transform_indices = @transform_4, window_bounds = array<i64: 1, 128>}, {pipeline_mode = #tpu.pipeline_mode<synchronous>, transform_indices = @transform_5, window_bounds = array<i64: 128, 128>}, {pipeline_mode = #tpu.pipeline_mode<synchronous>, transform_indices = @transform_6, window_bounds = array<i64: 1, 128>}, {transform_indices = @transform_7, window_bounds = array<i64: 8, 128>}]} {
    %c0 = arith.constant 0 : index
    %c0_0 = arith.constant 0 : index
    %0 = vector.load %arg1[%c0, %c0_0] : memref<8x16xf32, #tpu.memory_space<vmem>>, vector<8x16xf32>
    %c0_1 = arith.constant 0 : index
    %c0_2 = arith.constant 0 : index
    %1 = vector.load %arg2[%c0_1, %c0_2] : memref<16x128xf32, #tpu.memory_space<vmem>>, vector<16x128xf32>
    %c0_3 = arith.constant 0 : index
    %c0_4 = arith.constant 0 : index
    %2 = vector.load %arg3[%c0_3, %c0_4] : memref<1x128xf32, #tpu.memory_space<vmem>>, vector<1x128xf32>
    %cst = arith.constant dense<0.000000e+00> : vector<8x128xf32>
    %3 = tpu.matmul %0, %1, %cst {dimension_numbers = #tpu.dot_dimension_numbers<[1], [0], [0], [1], [0, 0, 1, 1], [], []>} : vector<8x16xf32>, vector<16x128xf32>, vector<8x128xf32> -> vector<8x128xf32>
    %4 = vector.broadcast %2 : vector<1x128xf32> to vector<8x128xf32>
    %5 = arith.addf %3, %4 : vector<8x128xf32>
    %cst_5 = arith.constant 0.000000e+00 : f32
    %6 = vector.broadcast %cst_5 : f32 to vector<8x128xf32>
    %7 = arith.maximumf %5, %6 : vector<8x128xf32>
    %c0_6 = arith.constant 0 : index
    %c0_7 = arith.constant 0 : index
    %8 = vector.load %arg4[%c0_6, %c0_7] : memref<128x128xf32, #tpu.memory_space<vmem>>, vector<128x128xf32>
    %c0_8 = arith.constant 0 : index
    %c0_9 = arith.constant 0 : index
    %9 = vector.load %arg5[%c0_8, %c0_9] : memref<1x128xf32, #tpu.memory_space<vmem>>, vector<1x128xf32>
    %cst_10 = arith.constant dense<0.000000e+00> : vector<8x128xf32>
    %10 = tpu.matmul %7, %8, %cst_10 {dimension_numbers = #tpu.dot_dimension_numbers<[1], [0], [0], [1], [0, 0, 1, 1], [], []>} : vector<8x128xf32>, vector<128x128xf32>, vector<8x128xf32> -> vector<8x128xf32>
    %11 = vector.broadcast %9 : vector<1x128xf32> to vector<8x128xf32>
    %12 = arith.addf %10, %11 : vector<8x128xf32>
    %cst_11 = arith.constant 0.000000e+00 : f32
    %13 = vector.broadcast %cst_11 : f32 to vector<8x128xf32>
    %14 = arith.maximumf %12, %13 : vector<8x128xf32>
    %c0_12 = arith.constant 0 : index
    %c0_13 = arith.constant 0 : index
    %15 = vector.load %arg6[%c0_12, %c0_13] : memref<128x128xf32, #tpu.memory_space<vmem>>, vector<128x128xf32>
    %c0_14 = arith.constant 0 : index
    %c0_15 = arith.constant 0 : index
    %16 = vector.load %arg7[%c0_14, %c0_15] : memref<1x128xf32, #tpu.memory_space<vmem>>, vector<1x128xf32>
    %cst_16 = arith.constant dense<0.000000e+00> : vector<8x128xf32>
    %17 = tpu.matmul %14, %15, %cst_16 {dimension_numbers = #tpu.dot_dimension_numbers<[1], [0], [0], [1], [0, 0, 1, 1], [], []>} : vector<8x128xf32>, vector<128x128xf32>, vector<8x128xf32> -> vector<8x128xf32>
    %18 = vector.broadcast %16 : vector<1x128xf32> to vector<8x128xf32>
    %19 = arith.addf %17, %18 : vector<8x128xf32>
    %c0_17 = arith.constant 0 : index
    %c0_18 = arith.constant 0 : index
    %20 = vector.load %arg8[%c0_17, %c0_18] : memref<8x128xf32, #tpu.memory_space<vmem>>, vector<8x128xf32>
    tpu.vector_store %arg8[%c0_17, %c0_18], %19 {strides = array<i32>} : memref<8x128xf32, #tpu.memory_space<vmem>>, vector<8x128xf32>,
    return
  }
  func.func @transform_0(%arg0: i32) -> (i32, i32) {
    %c0_i32 = arith.constant 0 : i32
    %c0_i32_0 = arith.constant 0 : i32
    return %arg0, %c0_i32 : i32, i32
  }
  func.func @transform_1(%arg0: i32) -> (i32, i32) {
    %c0_i32 = arith.constant 0 : i32
    %c0_i32_0 = arith.constant 0 : i32
    %c0_i32_1 = arith.constant 0 : i32
    return %c0_i32, %c0_i32_0 : i32, i32
  }
  func.func @transform_2(%arg0: i32) -> (i32, i32) {
    %c0_i32 = arith.constant 0 : i32
    %c0_i32_0 = arith.constant 0 : i32
    %c0_i32_1 = arith.constant 0 : i32
    return %c0_i32, %c0_i32_0 : i32, i32
  }
  func.func @transform_3(%arg0: i32) -> (i32, i32) {
    %c0_i32 = arith.constant 0 : i32
    %c0_i32_0 = arith.constant 0 : i32
    %c0_i32_1 = arith.constant 0 : i32
    return %c0_i32, %c0_i32_0 : i32, i32
  }
  func.func @transform_4(%arg0: i32) -> (i32, i32) {
    %c0_i32 = arith.constant 0 : i32
    %c0_i32_0 = arith.constant 0 : i32
    %c0_i32_1 = arith.constant 0 : i32
    return %c0_i32, %c0_i32_0 : i32, i32
  }
  func.func @transform_5(%arg0: i32) -> (i32, i32) {
    %c0_i32 = arith.constant 0 : i32
    %c0_i32_0 = arith.constant 0 : i32
    %c0_i32_1 = arith.constant 0 : i32
    return %c0_i32, %c0_i32_0 : i32, i32
  }
  func.func @transform_6(%arg0: i32) -> (i32, i32) {
    %c0_i32 = arith.constant 0 : i32
    %c0_i32_0 = arith.constant 0 : i32
    %c0_i32_1 = arith.constant 0 : i32
    return %c0_i32, %c0_i32_0 : i32, i32
  }
  func.func @transform_7(%arg0: i32) -> (i32, i32) {
    %c0_i32 = arith.constant 0 : i32
    %c0_i32_0 = arith.constant 0 : i32
    return %arg0, %c0_i32 : i32, i32
  }
}

</mosaic_0001>

<llo_original>
// kernel: forecasting_model_forward.1
$region0: #{forecasting_model_forward.1}
  #allocation0 [shape = 'u32[]', space=smem, size = 0x4, offset = 0x4, fixed_abs, tag = 'smem constant byte address 0x4 - core index']
  #allocation1 [shape = 'u32[72,128]{1,0:T(1,128)}', space=vmem, size = 0x9000, scoped, tag = 'internal scratch']
  %s0 = inlined_call_operand.hbm [shape: f32[8,16], index: 0, kind: input, shape index: {}]
  %s1 = inlined_call_operand.hbm [shape: f32[16,128], index: 1, kind: input, shape index: {}]
  %s2 = inlined_call_operand.vmem [shape: f32[1,128], index: 2, kind: input, shape index: {}]
  %s3 = inlined_call_operand.hbm [shape: f32[128,128], index: 3, kind: input, shape index: {}]
  %s4 = inlined_call_operand.vmem [shape: f32[1,128], index: 4, kind: input, shape index: {}]
  %s5 = inlined_call_operand.hbm [shape: f32[128,128], index: 5, kind: input, shape index: {}]
  %s6 = inlined_call_operand.vmem [shape: f32[1,128], index: 6, kind: input, shape index: {}]
  %s7 = inlined_call_operand.hbm [shape: f32[8,128], index: 7, kind: output, shape index: {}]
  %s8 = sld [smem:[#allocation0]]
  $region54: #{forecasting_model_forward.1} parent=0
    _
  %s10 = ssub.s32 1, %s8
  %s11 = scalar_select 0, %s10, %s8
  $region1: #{forecasting_model_forward.1} parent=0
    #allocation2 [shape = 'u8[4096]{0}', space=vmem, size = 0x1000, scoped, tag = 'input window, operand 0, single buffered']
    #allocation3 [shape = 's32[1]{0}', space=sflag, size = 0x4, scoped, tag = 'scoped memory for forecasting_model_forward.1']
    #allocation4 [shape = 's32[1]{0}', space=sflag, size = 0x4, scoped, tag = 'scoped memory for forecasting_model_forward.1']
    #allocation5 [shape = 'u8[8192]{0}', space=vmem, size = 0x2000, scoped, tag = 'input window, operand 1, single buffered']
    #allocation6 [shape = 's32[1]{0}', space=sflag, size = 0x4, scoped, tag = 'scoped memory for forecasting_model_forward.1']
    #allocation7 [shape = 'u8[65536]{0}', space=vmem, size = 0x10000, scoped, tag = 'input window, operand 3, single buffered']
    #allocation8 [shape = 'u8[65536]{0}', space=vmem, size = 0x10000, scoped, tag = 'input window, operand 5, single buffered']
    #allocation9 [shape = 's32[1]{0}', space=sflag, size = 0x4, scoped, tag = 'scoped memory for forecasting_model_forward.1']
    #allocation10 [shape = 'u8[4096]{0}', space=vmem, size = 0x1000, scoped, tag = 'output window, operand 0, single buffered']
    %12 = vsyncpa [#allocation3], 0
    %13 = vsyncpa [#allocation6], 0
    %14 = vsyncpa [#allocation9], 0
    %15 = vsyncpa [#allocation4], 0
    // Predicated region
    $region2: #{forecasting_model_forward.1} parent=1 // pred_check
      _
    $region3: #{forecasting_model_forward.1} parent=1 // pred_check_branch
      %17 = sbr.rel (0) target = $region5
    $region4: #{forecasting_model_forward.1} parent=1 // pred_region
      %19 = vsyncadd [#allocation3], 0
      %s21 = sshll.u32 %s0, 4
      %s22 = int_to_ptr.hbm [resolvable:$true] %s21
      %s23 = sshll.u32 [#allocation2], 4
      %s24 = int_to_ptr.vmem [resolvable:$true] %s23
      %26 = dma.hbm_to_vmem [thread:$0]  %s22, 128, %s24, [#allocation3]
    $region5: #{forecasting_model_forward.1} parent=1 // pred_fallthru
      _
    // Predicated region
    $region6: #{forecasting_model_forward.1} parent=1 // pred_check
      _
    $region7: #{forecasting_model_forward.1} parent=1 // pred_check_branch
      %28 = sbr.rel (0) target = $region9
    $region8: #{forecasting_model_forward.1} parent=1 // pred_region
      %30 = vsyncadd [#allocation6], 0
      %s31 = sshll.u32 %s1, 4
      %s32 = int_to_ptr.hbm [resolvable:$true] %s31
      %s33 = sshll.u32 [#allocation5], 4
      %s34 = int_to_ptr.vmem [resolvable:$true] %s33
      %39 = dma.hbm_to_vmem [thread:$0]  %s32, 256, %s34, [#allocation6], 128, 128, 8
    $region9: #{forecasting_model_forward.1} parent=1 // pred_fallthru
      _
    // Predicated region
    $region10: #{forecasting_model_forward.1} parent=1 // pred_check
      _
    $region11: #{forecasting_model_forward.1} parent=1 // pred_check_branch
      %41 = sbr.rel (0) target = $region13
    $region12: #{forecasting_model_forward.1} parent=1 // pred_region
      _
    $region13: #{forecasting_model_forward.1} parent=1 // pred_fallthru
      _
    // Predicated region
    $region14: #{forecasting_model_forward.1} parent=1 // pred_check
      _
    $region15: #{forecasting_model_forward.1} parent=1 // pred_check_branch
      %43 = sbr.rel (0) target = $region17
    $region16: #{forecasting_model_forward.1} parent=1 // pred_region
      %45 = vsyncadd [#allocation6], 0
      %s46 = sshll.u32 %s3, 4
      %s47 = int_to_ptr.hbm [resolvable:$true] %s46
      %s48 = sshll.u32 [#allocation7], 4
      %s49 = int_to_ptr.vmem [resolvable:$true] %s48
      %54 = dma.hbm_to_vmem [thread:$0]  %s47, 2048, %s49, [#allocation6], 128, 128, 8
    $region17: #{forecasting_model_forward.1} parent=1 // pred_fallthru
      _
    // Predicated region
    $region18: #{forecasting_model_forward.1} parent=1 // pred_check
      _
    $region19: #{forecasting_model_forward.1} parent=1 // pred_check_branch
      %56 = sbr.rel (0) target = $region21
    $region20: #{forecasting_model_forward.1} parent=1 // pred_region
      _
    $region21: #{forecasting_model_forward.1} parent=1 // pred_fallthru
      _
    // Predicated region
    $region22: #{forecasting_model_forward.1} parent=1 // pred_check
      _
    $region23: #{forecasting_model_forward.1} parent=1 // pred_check_branch
      %58 = sbr.rel (0) target = $region25
    $region24: #{forecasting_model_forward.1} parent=1 // pred_region
      %60 = vsyncadd [#allocation9], 0
      %s61 = sshll.u32 %s5, 4
      %s62 = int_to_ptr.hbm [resolvable:$true] %s61
      %s63 = sshll.u32 [#allocation8], 4
      %s64 = int_to_ptr.vmem [resolvable:$true] %s63
      %69 = dma.hbm_to_vmem [thread:$0]  %s62, 2048, %s64, [#allocation9], 128, 128, 8
    $region25: #{forecasting_model_forward.1} parent=1 // pred_fallthru
      _
    // Predicated region
    $region26: #{forecasting_model_forward.1} parent=1 // pred_check
      _
    $region27: #{forecasting_model_forward.1} parent=1 // pred_check_branch
      %71 = sbr.rel (0) target = $region29
    $region28: #{forecasting_model_forward.1} parent=1 // pred_region
      _
    $region29: #{forecasting_model_forward.1} parent=1 // pred_fallthru
      _
    // Predicated region
    $region30: #{forecasting_model_forward.1} parent=1 // pred_check
      _
    $region31: #{forecasting_model_forward.1} parent=1 // pred_check_branch
      %73 = sbr.rel (0) target = $region33
    $region32: #{forecasting_model_forward.1} parent=1 // pred_region
      %75 = dma.done [#allocation3], 128
    $region33: #{forecasting_model_forward.1} parent=1 // pred_fallthru
      _
    // Predicated region
    $region34: #{forecasting_model_forward.1} parent=1 // pred_check
      _
    $region35: #{forecasting_model_forward.1} parent=1 // pred_check_branch
      %77 = sbr.rel (0) target = $region37
    $region36: #{forecasting_model_forward.1} parent=1 // pred_region
      %79 = dma.done [#allocation6], 256
    $region37: #{forecasting_model_forward.1} parent=1 // pred_fallthru
      _
    // Predicated region
    $region38: #{forecasting_model_forward.1} parent=1 // pred_check
      _
    $region39: #{forecasting_model_forward.1} parent=1 // pred_check_branch
      %81 = sbr.rel (0) target = $region41
    $region40: #{forecasting_model_forward.1} parent=1 // pred_region
      %83 = dma.done [#allocation6], 2048
    $region41: #{forecasting_model_forward.1} parent=1 // pred_fallthru
      _
    // Predicated region
    $region42: #{forecasting_model_forward.1} parent=1 // pred_check
      _
    $region43: #{forecasting_model_forward.1} parent=1 // pred_check_branch
      %85 = sbr.rel (0) target = $region45
    $region44: #{forecasting_model_forward.1} parent=1 // pred_region
      %87 = dma.done [#allocation9], 2048
    $region45: #{forecasting_model_forward.1} parent=1 // pred_fallthru
      _
    %v88 = vld [vmem:[#allocation2] sm:$0xff]
    %v89 = vld [vmem:[#allocation5] sm:$0xff]
    %v90 = vld [vmem:[#allocation5 + $0x8] sm:$0xff]
    %v91 = vld [vmem:[%s2] sm:$0x1]
    %v93 = vperm.slane %v91, 0
    %vm95 = vcmask 130048
    %v97 = vsel %vm95, %v88, 0
    %99 = vmatpush.msra.mxu0 0.0
    %100 = vmatpush.msra.mxu0 0.0
    %101 = vmatpush.msra.mxu0 0.0
    %102 = vmatpush.msra.mxu0 0.0
    %103 = vmatpush.msra.mxu0 0.0
    %104 = vmatpush.msra.mxu0 0.0
    %105 = vmatpush.msra.mxu0 0.0
    %106 = vmatpush.msra.mxu0 0.0
    %107 = vmatpush.msra.mxu0 0.0
    %108 = vmatpush.msra.mxu0 0.0
    %109 = vmatpush.msra.mxu0 0.0
    %110 = vmatpush.msra.mxu0 0.0
    %111 = vmatpush.msra.mxu0 0.0
    %112 = vmatpush.msra.mxu0 0.0
    %113 = vmatpush.msra.mxu0 %v90
    %114 = vmatpush.msra.mxu0 %v89
    %115 = vmatmul.f32.gmra.mxu0 %v97
    %v116 = vpop.f32.mrf.mxu0
    %v117 = vadd.f32 %v93, %v116
    %118 = vdwg.mxu0
    %v119 = vmax.f32 %v117, 0.0
    %v120 = vld [vmem:[#allocation7] sm:$0xff]
    %v121 = vld [vmem:[#allocation7 + $0x8] sm:$0xff]
    %v122 = vld [vmem:[#allocation7 + $0x10] sm:$0xff]
    %v123 = vld [vmem:[#allocation7 + $0x18] sm:$0xff]
    %v124 = vld [vmem:[#allocation7 + $0x20] sm:$0xff]
    %v125 = vld [vmem:[#allocation7 + $0x28] sm:$0xff]
    %v126 = vld [vmem:[#allocation7 + $0x30] sm:$0xff]
    %v127 = vld [vmem:[#allocation7 + $0x38] sm:$0xff]
    %v128 = vld [vmem:[#allocation7 + $0x40] sm:$0xff]
    %v129 = vld [vmem:[#allocation7 + $0x48] sm:$0xff]
    %v130 = vld [vmem:[#allocation7 + $0x50] sm:$0xff]
    %v131 = vld [vmem:[#allocation7 + $0x58] sm:$0xff]
    %v132 = vld [vmem:[#allocation7 + $0x60] sm:$0xff]
    %v133 = vld [vmem:[#allocation7 + $0x68] sm:$0xff]
    %v134 = vld [vmem:[#allocation7 + $0x70] sm:$0xff]
    %v135 = vld [vmem:[#allocation7 + $0x78] sm:$0xff]
    %v136 = vld [vmem:[%s4] sm:$0x1]
    %v138 = vperm.slane %v136, 0
    %140 = vmatpush.msra.mxu0 %v135
    %141 = vmatpush.msra.mxu0 %v134
    %142 = vmatpush.msra.mxu0 %v133
    %143 = vmatpush.msra.mxu0 %v132
    %144 = vmatpush.msra.mxu0 %v131
    %145 = vmatpush.msra.mxu0 %v130
    %146 = vmatpush.msra.mxu0 %v129
    %147 = vmatpush.msra.mxu0 %v128
    %148 = vmatpush.msra.mxu0 %v127
    %149 = vmatpush.msra.mxu0 %v126
    %150 = vmatpush.msra.mxu0 %v125
    %151 = vmatpush.msra.mxu0 %v124
    %152 = vmatpush.msra.mxu0 %v123
    %153 = vmatpush.msra.mxu0 %v122
    %154 = vmatpush.msra.mxu0 %v121
    %155 = vmatpush.msra.mxu0 %v120
    %156 = vmatmul.f32.gmra.mxu0 %v119
    %v157 = vpop.f32.mrf.mxu0
    %v158 = vadd.f32 %v138, %v157
    %159 = vdwg.mxu0
    %v160 = vmax.f32 %v158, 0.0
    %v161 = vld [vmem:[#allocation8] sm:$0xff]
    %v162 = vld [vmem:[#allocation8 + $0x8] sm:$0xff]
    %v163 = vld [vmem:[#allocation8 + $0x10] sm:$0xff]
    %v164 = vld [vmem:[#allocation8 + $0x18] sm:$0xff]
    %v165 = vld [vmem:[#allocation8 + $0x20] sm:$0xff]
    %v166 = vld [vmem:[#allocation8 + $0x28] sm:$0xff]
    %v167 = vld [vmem:[#allocation8 + $0x30] sm:$0xff]
    %v168 = vld [vmem:[#allocation8 + $0x38] sm:$0xff]
    %v169 = vld [vmem:[#allocation8 + $0x40] sm:$0xff]
    %v170 = vld [vmem:[#allocation8 + $0x48] sm:$0xff]
    %v171 = vld [vmem:[#allocation8 + $0x50] sm:$0xff]
    %v172 = vld [vmem:[#allocation8 + $0x58] sm:$0xff]
    %v173 = vld [vmem:[#allocation8 + $0x60] sm:$0xff]
    %v174 = vld [vmem:[#allocation8 + $0x68] sm:$0xff]
    %v175 = vld [vmem:[#allocation8 + $0x70] sm:$0xff]
    %v176 = vld [vmem:[#allocation8 + $0x78] sm:$0xff]
    %v177 = vld [vmem:[%s6] sm:$0x1]
    %v179 = vperm.slane %v177, 0
    %181 = vmatpush.msra.mxu0 %v176
    %182 = vmatpush.msra.mxu0 %v175
    %183 = vmatpush.msra.mxu0 %v174
    %184 = vmatpush.msra.mxu0 %v173
    %185 = vmatpush.msra.mxu0 %v172
    %186 = vmatpush.msra.mxu0 %v171
    %187 = vmatpush.msra.mxu0 %v170
    %188 = vmatpush.msra.mxu0 %v169
    %189 = vmatpush.msra.mxu0 %v168
    %190 = vmatpush.msra.mxu0 %v167
    %191 = vmatpush.msra.mxu0 %v166
    %192 = vmatpush.msra.mxu0 %v165
    %193 = vmatpush.msra.mxu0 %v164
    %194 = vmatpush.msra.mxu0 %v163
    %195 = vmatpush.msra.mxu0 %v162
    %196 = vmatpush.msra.mxu0 %v161
    %197 = vmatmul.f32.gmra.mxu0 %v160
    %v198 = vpop.f32.mrf.mxu0
    %v199 = vadd.f32 %v179, %v198
    %200 = vdwg.mxu0
    %201 = vst [vmem:[#allocation10] sm:$0xff] %v199
    // Predicated region
    $region46: #{forecasting_model_forward.1} parent=1 // pred_check
      _
    $region47: #{forecasting_model_forward.1} parent=1 // pred_check_branch
      %203 = sbr.rel (0) target = $region49
    $region48: #{forecasting_model_forward.1} parent=1 // pred_region
      %205 = vsyncadd [#allocation4], 0
      %s207 = sshll.u32 [#allocation10], 4
      %s208 = int_to_ptr.vmem [resolvable:$true] %s207
      %s209 = sshll.u32 %s7, 4
      %s210 = int_to_ptr.hbm [resolvable:$true] %s209
      %212 = dma.vmem_to_hbm [thread:$0]  %s208, 128, %s210, [#allocation4]
    $region49: #{forecasting_model_forward.1} parent=1 // pred_fallthru
      _
    // Predicated region
    $region50: #{forecasting_model_forward.1} parent=1 // pred_check
      _
    $region51: #{forecasting_model_forward.1} parent=1 // pred_check_branch
      %214 = sbr.rel (0) target = $region53
    $region52: #{forecasting_model_forward.1} parent=1 // pred_region
      %216 = dma.done [#allocation4], 128
    $region53: #{forecasting_model_forward.1} parent=1 // pred_fallthru
      _
    %217 = vsyncpa [#allocation3], 1
    %218 = vsyncpa [#allocation6], 1
    %219 = vsyncpa [#allocation9], 1
    %220 = vsyncpa [#allocation4], 1

</llo_original>
